<compile_context>
chip_gen: v6e
topology: v6e:2x2x1
jax: 0.10.0
libtpu: 0.0.40
codegen_flags: <defaults>
</compile_context>

<pallas_src>
import functools

import jax
import jax.numpy as jnp
from jax.experimental import pallas as pl
from jax.experimental.pallas import tpu as pltpu


def _lane_fold(x, width):
    """Sum (R, L) -> (R, width) via lane-aligned chunk adds (pure full-vreg VPU adds)."""
    n = x.shape[-1] // width
    out = x[:, :width]
    for j in range(1, n):
        out = out + x[:, j * width:(j + 1) * width]
    return out


def _dice_ce_kernel(pred_ref, targ_ref, out_ref, acc_ref, *,
                    hw, hw_tile, k_per_split, fold_w, need_mask):
    k = pl.program_id(2)

    @pl.when(k == 0)
    def _init():
        acc_ref[...] = jnp.zeros_like(acc_ref)

    # Stream native dtype from HBM, cast to f32 for the math / accumulation.
    x = pred_ref[...].astype(jnp.float32)   # (nc_tile, hw_tile) logits
    t = targ_ref[...].astype(jnp.float32)   # (nc_tile, hw_tile) targets in [0, 1]

    # Fused, numerically stable sigmoid + logits-form BCE: one exp, one log1p, one vrcp.
    u = jnp.exp(-jnp.abs(x))                                  # exp(-|x|) in (0, 1]
    lu = jnp.log1p(u)                                         # log(1 + exp(-|x|))
    p = jnp.where(x >= 0.0, 1.0, u) * pl.reciprocal(1.0 + u, approx=True)  # sigmoid(x)
    # -(t*log p + (1-t)*log(1-p)) == max(x,0) - x*t + lu (exact); min(.,100) ~ -100 clamp.
    bce = jnp.minimum(jnp.maximum(x, 0.0) - x * t + lu, 100.0)

    term_i = t * p      # dice numerator contribution
    term_d = t + p      # merged dice denominator contribution
    term_b = bce

    if need_mask:
        # Partial last spatial tile: zero out-of-range lanes before accumulating.
        h = pl.program_id(0)
        col0 = (h * k_per_split + k) * hw_tile
        cols = col0 + jax.lax.broadcasted_iota(jnp.int32, x.shape, 1)
        valid = cols < hw
        zero = jnp.zeros_like(term_i)
        term_i = jnp.where(valid, term_i, zero)
        term_d = jnp.where(valid, term_d, zero)
        term_b = jnp.where(valid, term_b, zero)

    # Lane-dense accumulation: full-vreg adds only; no cross-lane reduce per tile.
    acc_ref[0] += _lane_fold(term_i, fold_w)
    acc_ref[1] += _lane_fold(term_d, fold_w)
    acc_ref[2] += _lane_fold(term_b, fold_w)

    @pl.when(k == pl.num_programs(2) - 1)
    def _finalize():
        out_ref[0] = acc_ref[...]           # single lane-dense store


def _native_sublanes(itemsize):
    # Native sublane packing: 8 for f32, 16 for bf16, 32 for int8/fp8.
    return max(8, 32 // max(int(itemsize), 1))


def dice_ce_loss(pred, target, *, tile_budget_bytes=2 * 1024 * 1024, max_hw_tile=8192):
    """pred, target: (N, C, H, W) arrays. Inputs stream in their native dtype (pass
    bf16 logits / int8-bf16 targets on bandwidth-bound v5e/v6e). Returns scalar f32."""
    N, C, H, W = pred.shape
    nc, hw = N * C, H * W
    p2 = pred.reshape(nc, hw)
    t2 = target.reshape(nc, hw)
    ip, it = p2.dtype.itemsize, t2.dtype.itemsize

    # Sublane tile: native packing of the narrowest streamed dtype, else full extent.
    native = _native_sublanes(min(ip, it))
    nc_tile = native if nc % native == 0 else nc
    nc_blocks = nc // nc_tile

    # Lane tile: multiple of 128, sized so double-buffered native-dtype inputs plus
    # ~10 f32 elementwise intermediates fit the budget on every generation.
    if hw < 128:
        hw_tile = hw
    else:
        per_lane = nc_tile * (2 * (ip + it) + 40)
        max_lanes = max(128, tile_budget_bytes // per_lane)
        hw_tile = min((hw // 128) * 128, (max_lanes // 128) * 128, max_hw_tile)
    fold_w = min(128, hw_tile)
    num_k = pl.cdiv(hw, hw_tile)
    need_mask = (hw % hw_tile) != 0

    # Split the HW range over a leading "parallel" axis so both v7x TensorCores get
    # work even when the NC axis has a single tile (no-op on 1-TC v5e/v6e).
    hw_split = 2 if (num_k >= 2 and num_k % 2 == 0) else 1
    k_per_split = num_k // hw_split

    grid = (hw_split, nc_blocks, k_per_split)
    kernel = functools.partial(
        _dice_ce_kernel, hw=hw, hw_tile=hw_tile, k_per_split=k_per_split,
        fold_w=fold_w, need_mask=need_mask)

    in_map = lambda h, i, k: (i, h * k_per_split + k)
    sums = pl.pallas_call(
        kernel,
        out_shape=jax.ShapeDtypeStruct((hw_split, 3, nc, fold_w), jnp.float32),
        grid_spec=pltpu.PrefetchScalarGridSpec(
            num_scalar_prefetch=0,
            grid=grid,
            in_specs=[
                pl.BlockSpec((nc_tile, hw_tile), in_map),
                pl.BlockSpec((nc_tile, hw_tile), in_map),
            ],
            out_specs=pl.BlockSpec((1, 3, nc_tile, fold_w),
                                   lambda h, i, k: (h, 0, i, 0)),
            scratch_shapes=[pltpu.VMEM((3, nc_tile, fold_w), jnp.float32)],
        ),
        compiler_params=pltpu.CompilerParams(
            dimension_semantics=("parallel", "parallel", "arbitrary")),
        cost_estimate=pl.CostEstimate(
            flops=16 * nc * hw,
            transcendentals=3 * nc * hw,
            bytes_accessed=nc * hw * (ip + it) + hw_split * 3 * nc * fold_w * 4,
        ),
    )(p2, t2)

    stats = jnp.sum(sums, axis=(0, 3))          # (3, nc): inter, denom, bce sums
    inter, denom, bsum = stats[0], stats[1], stats[2]
    smooth = jnp.float32(1e-5)
    dice = jnp.mean(1.0 - (2.0 * inter + smooth) / (denom + smooth))
    bce = jnp.sum(bsum) / jnp.float32(nc * hw)
    return dice + bce


def _reference(pred, target):
    """Pure-JAX reference (PyTorch DiceLoss(sigmoid=True) + BCELoss(sigmoid(pred), target))."""
    p = jax.nn.sigmoid(pred.astype(jnp.float32))
    t = target.astype(jnp.float32)
    inter = jnp.sum(t * p, axis=(2, 3))
    denom = jnp.sum(t, axis=(2, 3)) + jnp.sum(p, axis=(2, 3))
    dice = jnp.mean(1.0 - (2.0 * inter + 1e-5) / (denom + 1e-5))
    log_p = jnp.maximum(jnp.log(p), -100.0)
    log_1mp = jnp.maximum(jnp.log1p(-p), -100.0)
    bce = jnp.mean(-(t * log_p + (1.0 - t) * log_1mp))
    return dice + bce


if __name__ == "__main__":
    key = jax.random.PRNGKey(0)
    k_pred, k_targ = jax.random.split(key)

    def check(pred, target, **kw):
        ref = jax.block_until_ready(_reference(pred, target))
        loss = jax.block_until_ready(dice_ce_loss(pred, target, **kw))
        assert jnp.isfinite(loss), "loss is not finite"
        assert jnp.abs(loss - ref) < 2e-3, f"mismatch: kernel={loss}, ref={ref}"

    # 1) Lane-aligned shape, single spatial tile.
    N, C, H, W = 2, 4, 16, 16
    pred = jax.random.normal(k_pred, (N, C, H, W), dtype=jnp.float32)
    target = jax.random.bernoulli(k_targ, 0.5, (N, C, H, W)).astype(jnp.float32)
    check(pred, target)

    # 2) Tiny budget -> multiple spatial tiles + hw_split=2 (accumulator + megacore path).
    check(pred, target, tile_budget_bytes=8 * 1024)

    # 3) H*W not a multiple of 128 -> masked partial last tile.
    pred3 = jax.random.normal(k_pred, (2, 4, 12, 20), dtype=jnp.float32)
    target3 = jax.random.bernoulli(k_targ, 0.5, (2, 4, 12, 20)).astype(jnp.float32)
    check(pred3, target3, tile_budget_bytes=8 * 1024)

    # 4) bf16 logits streamed in native dtype (in-kernel cast path).
    check(pred.astype(jnp.bfloat16), target)

    print("KERNEL_OK")
</pallas_src>

<mosaic_0001>
module attributes {stable_mosaic.version = 11 : i64} {
  func.func @_dice_ce_kernel(%arg0: i32, %arg1: i32, %arg2: i32, %arg3: memref<8x256xf32, #tpu.memory_space<vmem>>, %arg4: memref<8x256xf32, #tpu.memory_space<vmem>>, %arg5: memref<1x3x8x128xf32, #tpu.memory_space<vmem>>, %arg6: memref<3x8x128xf32, #tpu.memory_space<vmem>>) attributes {dimension_semantics = [#tpu.dimension_semantics<parallel>, #tpu.dimension_semantics<parallel>, #tpu.dimension_semantics<arbitrary>], iteration_bounds = array<i64: 1, 1, 1>, scalar_prefetch = 0 : i64, scratch_operands = 1 : i64, tpu.core_type = #tpu.core_type<tc>, window_params = [{transform_indices = @transform_0, window_bounds = array<i64: 8, 256>}, {transform_indices = @transform_1, window_bounds = array<i64: 8, 256>}, {transform_indices = @transform_2, window_bounds = array<i64: 1, 3, 8, 128>}]} {
    %c0_i32 = arith.constant 0 : i32
    %0 = arith.cmpi eq, %arg2, %c0_i32 : i32
    %1 = arith.extui %0 : i1 to i32
    %c0_i32_0 = arith.constant 0 : i32
    %2 = arith.cmpi ne, %1, %c0_i32_0 : i32
    scf.if %2 {
      %cst_27 = arith.constant 0.000000e+00 : f32
      %57 = vector.broadcast %cst_27 : f32 to vector<3x8x128xf32>
      %c0_28 = arith.constant 0 : index
      %c0_29 = arith.constant 0 : index
      %c0_30 = arith.constant 0 : index
      %58 = vector.load %arg6[%c0_28, %c0_29, %c0_30] : memref<3x8x128xf32, #tpu.memory_space<vmem>>, vector<3x8x128xf32>
      tpu.vector_store %arg6[%c0_28, %c0_29, %c0_30], %57 {strides = array<i32>} : memref<3x8x128xf32, #tpu.memory_space<vmem>>, vector<3x8x128xf32>,
    } else {
    }
    %c0 = arith.constant 0 : index
    %c0_1 = arith.constant 0 : index
    %3 = vector.load %arg3[%c0, %c0_1] : memref<8x256xf32, #tpu.memory_space<vmem>>, vector<8x256xf32>
    %c0_2 = arith.constant 0 : index
    %c0_3 = arith.constant 0 : index
    %4 = vector.load %arg4[%c0_2, %c0_3] : memref<8x256xf32, #tpu.memory_space<vmem>>, vector<8x256xf32>
    %5 = math.absf %3 : vector<8x256xf32>
    %cst = arith.constant 0.000000e+00 : f32
    %6 = vector.broadcast %cst : f32 to vector<8x256xf32>
    %7 = arith.subf %6, %5 : vector<8x256xf32>
    %8 = math.exp %7 : vector<8x256xf32>
    %9 = math.log1p %8 : vector<8x256xf32>
    %cst_4 = arith.constant 0.000000e+00 : f32
    %10 = vector.broadcast %cst_4 : f32 to vector<8x256xf32>
    %11 = arith.cmpf oge, %3, %10 : vector<8x256xf32>
    %cst_5 = arith.constant 1.000000e+00 : f32
    %12 = vector.broadcast %cst_5 : f32 to vector<8x256xf32>
    %13 = arith.select %11, %12, %8 : vector<8x256xi1>, vector<8x256xf32>
    %cst_6 = arith.constant 1.000000e+00 : f32
    %14 = vector.broadcast %cst_6 : f32 to vector<8x256xf32>
    %15 = arith.addf %14, %8 : vector<8x256xf32>
    %16 = tpu.reciprocal %15 {approx = true} : vector<8x256xf32> -> vector<8x256xf32>
    %17 = arith.mulf %13, %16 : vector<8x256xf32>
    %cst_7 = arith.constant 0.000000e+00 : f32
    %18 = vector.broadcast %cst_7 : f32 to vector<8x256xf32>
    %19 = arith.maximumf %3, %18 : vector<8x256xf32>
    %20 = arith.mulf %3, %4 : vector<8x256xf32>
    %21 = arith.subf %19, %20 : vector<8x256xf32>
    %22 = arith.addf %21, %9 : vector<8x256xf32>
    %cst_8 = arith.constant 1.000000e+02 : f32
    %23 = vector.broadcast %cst_8 : f32 to vector<8x256xf32>
    %24 = arith.minimumf %22, %23 : vector<8x256xf32>
    %25 = arith.mulf %4, %17 : vector<8x256xf32>
    %26 = arith.addf %4, %17 : vector<8x256xf32>
    %c0_9 = arith.constant 0 : index
    %c0_10 = arith.constant 0 : index
    %c0_11 = arith.constant 0 : index
    %27 = vector.load %arg6[%c0_9, %c0_10, %c0_11] : memref<3x8x128xf32, #tpu.memory_space<vmem>>, vector<1x8x128xf32>
    %28 = vector.shape_cast %27 : vector<1x8x128xf32> to vector<8x128xf32>
    %29 = vector.extract_strided_slice %25 {offsets = [0, 0], sizes = [8, 128], strides = [1, 1]} : vector<8x256xf32> to vector<8x128xf32>
    %30 = vector.extract_strided_slice %25 {offsets = [0, 128], sizes = [8, 128], strides = [1, 1]} : vector<8x256xf32> to vector<8x128xf32>
    %31 = arith.addf %29, %30 : vector<8x128xf32>
    %32 = arith.addf %28, %31 : vector<8x128xf32>
    %c0_12 = arith.constant 0 : index
    %c0_13 = arith.constant 0 : index
    %c0_14 = arith.constant 0 : index
    %33 = vector.load %arg6[%c0_12, %c0_13, %c0_14] : memref<3x8x128xf32, #tpu.memory_space<vmem>>, vector<1x8x128xf32>
    %34 = vector.shape_cast %33 : vector<1x8x128xf32> to vector<8x128xf32>
    %35 = vector.shape_cast %32 : vector<8x128xf32> to vector<1x8x128xf32>
    tpu.vector_store %arg6[%c0_12, %c0_13, %c0_14], %35 {strides = array<i32>} : memref<3x8x128xf32, #tpu.memory_space<vmem>>, vector<1x8x128xf32>,
    %c1 = arith.constant 1 : index
    %c0_15 = arith.constant 0 : index
    %c0_16 = arith.constant 0 : index
    %36 = vector.load %arg6[%c1, %c0_15, %c0_16] : memref<3x8x128xf32, #tpu.memory_space<vmem>>, vector<1x8x128xf32>
    %37 = vector.shape_cast %36 : vector<1x8x128xf32> to vector<8x128xf32>
    %38 = vector.extract_strided_slice %26 {offsets = [0, 0], sizes = [8, 128], strides = [1, 1]} : vector<8x256xf32> to vector<8x128xf32>
    %39 = vector.extract_strided_slice %26 {offsets = [0, 128], sizes = [8, 128], strides = [1, 1]} : vector<8x256xf32> to vector<8x128xf32>
    %40 = arith.addf %38, %39 : vector<8x128xf32>
    %41 = arith.addf %37, %40 : vector<8x128xf32>
    %c1_17 = arith.constant 1 : index
    %c0_18 = arith.constant 0 : index
    %c0_19 = arith.constant 0 : index
    %42 = vector.load %arg6[%c1_17, %c0_18, %c0_19] : memref<3x8x128xf32, #tpu.memory_space<vmem>>, vector<1x8x128xf32>
    %43 = vector.shape_cast %42 : vector<1x8x128xf32> to vector<8x128xf32>
    %44 = vector.shape_cast %41 : vector<8x128xf32> to vector<1x8x128xf32>
    tpu.vector_store %arg6[%c1_17, %c0_18, %c0_19], %44 {strides = array<i32>} : memref<3x8x128xf32, #tpu.memory_space<vmem>>, vector<1x8x128xf32>,
    %c2 = arith.constant 2 : index
    %c0_20 = arith.constant 0 : index
    %c0_21 = arith.constant 0 : index
    %45 = vector.load %arg6[%c2, %c0_20, %c0_21] : memref<3x8x128xf32, #tpu.memory_space<vmem>>, vector<1x8x128xf32>
    %46 = vector.shape_cast %45 : vector<1x8x128xf32> to vector<8x128xf32>
    %47 = vector.extract_strided_slice %24 {offsets = [0, 0], sizes = [8, 128], strides = [1, 1]} : vector<8x256xf32> to vector<8x128xf32>
    %48 = vector.extract_strided_slice %24 {offsets = [0, 128], sizes = [8, 128], strides = [1, 1]} : vector<8x256xf32> to vector<8x128xf32>
    %49 = arith.addf %47, %48 : vector<8x128xf32>
    %50 = arith.addf %46, %49 : vector<8x128xf32>
    %c2_22 = arith.constant 2 : index
    %c0_23 = arith.constant 0 : index
    %c0_24 = arith.constant 0 : index
    %51 = vector.load %arg6[%c2_22, %c0_23, %c0_24] : memref<3x8x128xf32, #tpu.memory_space<vmem>>, vector<1x8x128xf32>
    %52 = vector.shape_cast %51 : vector<1x8x128xf32> to vector<8x128xf32>
    %53 = vector.shape_cast %50 : vector<8x128xf32> to vector<1x8x128xf32>
    tpu.vector_store %arg6[%c2_22, %c0_23, %c0_24], %53 {strides = array<i32>} : memref<3x8x128xf32, #tpu.memory_space<vmem>>, vector<1x8x128xf32>,
    %c0_i32_25 = arith.constant 0 : i32
    %54 = arith.cmpi eq, %arg2, %c0_i32_25 : i32
    %55 = arith.extui %54 : i1 to i32
    %c0_i32_26 = arith.constant 0 : i32
    %56 = arith.cmpi ne, %55, %c0_i32_26 : i32
    scf.if %56 {
      %c0_27 = arith.constant 0 : index
      %c0_28 = arith.constant 0 : index
      %c0_29 = arith.constant 0 : index
      %57 = vector.load %arg6[%c0_27, %c0_28, %c0_29] : memref<3x8x128xf32, #tpu.memory_space<vmem>>, vector<3x8x128xf32>
      %c0_30 = arith.constant 0 : index
      %c0_31 = arith.constant 0 : index
      %c0_32 = arith.constant 0 : index
      %c0_33 = arith.constant 0 : index
      %58 = vector.load %arg5[%c0_30, %c0_31, %c0_32, %c0_33] : memref<1x3x8x128xf32, #tpu.memory_space<vmem>>, vector<1x3x8x128xf32>
      %59 = vector.shape_cast %58 : vector<1x3x8x128xf32> to vector<3x8x128xf32>
      %60 = vector.shape_cast %57 : vector<3x8x128xf32> to vector<1x3x8x128xf32>
      tpu.vector_store %arg5[%c0_30, %c0_31, %c0_32, %c0_33], %60 {strides = array<i32>} : memref<1x3x8x128xf32, #tpu.memory_space<vmem>>, vector<1x3x8x128xf32>,
    } else {
    }
    return
  }
  func.func @transform_0(%arg0: i32, %arg1: i32, %arg2: i32) -> (i32, i32) {
    %c1_i32 = arith.constant 1 : i32
    %0 = arith.muli %arg0, %c1_i32 : i32
    %1 = arith.addi %0, %arg2 : i32
    %c0_i32 = arith.constant 0 : i32
    return %arg1, %1 : i32, i32
  }
  func.func @transform_1(%arg0: i32, %arg1: i32, %arg2: i32) -> (i32, i32) {
    %c1_i32 = arith.constant 1 : i32
    %0 = arith.muli %arg0, %c1_i32 : i32
    %1 = arith.addi %0, %arg2 : i32
    %c0_i32 = arith.constant 0 : i32
    return %arg1, %1 : i32, i32
  }
  func.func @transform_2(%arg0: i32, %arg1: i32, %arg2: i32) -> (i32, i32, i32, i32) {
    %c0_i32 = arith.constant 0 : i32
    %c0_i32_0 = arith.constant 0 : i32
    %c0_i32_1 = arith.constant 0 : i32
    return %arg0, %c0_i32, %arg1, %c0_i32_0 : i32, i32, i32, i32
  }
}

</mosaic_0001>

<llo_original>
// kernel: tpu_custom_call.1
$region0: #{tpu_custom_call.1}
  #allocation0 [shape = 'u32[]', space=smem, size = 0x4, offset = 0x4, fixed_abs, tag = 'smem constant byte address 0x4 - core index']
  #allocation1 [shape = 'u32[144,128]{1,0:T(1,128)}', space=vmem, size = 0x12000, scoped, tag = 'internal scratch']
  #allocation2 [shape = 'f32[3,8,128]{2,1,0:T(8,128)}', space=vmem, size = 0x3000, scoped, tag = 'scratch operand']
  %s0 = inlined_call_operand.hbm [shape: f32[8,256], index: 0, kind: input, shape index: {}]
  %s1 = inlined_call_operand.hbm [shape: f32[8,256], index: 1, kind: input, shape index: {}]
  %s2 = inlined_call_operand.hbm [shape: f32[1,3,8,128], index: 2, kind: output, shape index: {}]
  %s3 = sld [smem:[#allocation0]]
  $region34: #{tpu_custom_call.1} parent=0
    _
  %s5 = ssub.s32 1, %s3
  %s6 = scalar_select 0, %s5, %s3
  $region1: #{tpu_custom_call.1} parent=0
    #allocation3 [shape = 'u8[8192]{0}', space=vmem, size = 0x2000, scoped, tag = 'input window, operand 0, single buffered']
    #allocation4 [shape = 's32[1]{0}', space=sflag, size = 0x4, scoped, tag = 'scoped memory for tpu_custom_call.1']
    #allocation5 [shape = 's32[1]{0}', space=sflag, size = 0x4, scoped, tag = 'scoped memory for tpu_custom_call.1']
    #allocation6 [shape = 'u8[8192]{0}', space=vmem, size = 0x2000, scoped, tag = 'input window, operand 1, single buffered']
    #allocation7 [shape = 's32[1]{0}', space=sflag, size = 0x4, scoped, tag = 'scoped memory for tpu_custom_call.1']
    #allocation8 [shape = 'u8[12288]{0}', space=vmem, size = 0x3000, scoped, tag = 'output window, operand 0, single buffered']
    %7 = vsyncpa [#allocation4], 0
    %8 = vsyncpa [#allocation7], 0
    %9 = vsyncpa [#allocation5], 0
    // Predicated region
    $region2: #{tpu_custom_call.1} parent=1 // pred_check
      _
    $region3: #{tpu_custom_call.1} parent=1 // pred_check_branch
      %11 = sbr.rel (0) target = $region5
    $region4: #{tpu_custom_call.1} parent=1 // pred_region
      %s12 = sadd.s32 0, 0
      %s13 = smul.u32 2, %s12
      %s15 = ssub.s32 256, 256
      %16 = vsyncadd [#allocation4], %s15
      %s17 = smul.addr %s13, 128
      %s18 = scalar_lea.hbm %s0, %s17
      %s20 = sshll.u32 [#allocation3], 4
      %s21 = int_to_ptr.vmem [resolvable:$true] %s20
      %23 = dma.hbm_to_vmem [thread:$0]  %s18, 256, %s21, [#allocation4]
    $region5: #{tpu_custom_call.1} parent=1 // pred_fallthru
      _
    // Predicated region
    $region6: #{tpu_custom_call.1} parent=1 // pred_check
      _
    $region7: #{tpu_custom_call.1} parent=1 // pred_check_branch
      %25 = sbr.rel (0) target = $region9
    $region8: #{tpu_custom_call.1} parent=1 // pred_region
      %s26 = sadd.s32 0, 0
      %s27 = smul.u32 2, %s26
      %s29 = ssub.s32 256, 256
      %30 = vsyncadd [#allocation7], %s29
      %s31 = smul.addr %s27, 128
      %s32 = scalar_lea.hbm %s1, %s31
      %s34 = sshll.u32 [#allocation6], 4
      %s35 = int_to_ptr.vmem [resolvable:$true] %s34
      %37 = dma.hbm_to_vmem [thread:$0]  %s32, 256, %s35, [#allocation7]
    $region9: #{tpu_custom_call.1} parent=1 // pred_fallthru
      _
    // Predicated region
    $region10: #{tpu_custom_call.1} parent=1 // pred_check
      _
    $region11: #{tpu_custom_call.1} parent=1 // pred_check_branch
      %39 = sbr.rel (0) target = $region13
    $region12: #{tpu_custom_call.1} parent=1 // pred_region
      %40 = dma.done [#allocation4], 256
    $region13: #{tpu_custom_call.1} parent=1 // pred_fallthru
      _
    // Predicated region
    $region14: #{tpu_custom_call.1} parent=1 // pred_check
      _
    $region15: #{tpu_custom_call.1} parent=1 // pred_check_branch
      %42 = sbr.rel (0) target = $region17
    $region16: #{tpu_custom_call.1} parent=1 // pred_region
      %43 = dma.done [#allocation7], 256
    $region17: #{tpu_custom_call.1} parent=1 // pred_fallthru
      _
    %s44 = sadd.s32 0, 0
    %s45 = smul.u32 2, %s44
    %s46 = sadd.s32 0, 0
    %s47 = smul.u32 2, %s46
    %p48 = scmp.eq.s32.totalorder 0, 0
    // Predicated region
    $region18: #{tpu_custom_call.1} parent=1 // pred_check
      %p49 = pneg %p48
    $region19: #{tpu_custom_call.1} parent=1 // pred_check_branch
      %51 = sbr.rel (%p49) target = $region21
    $region20: #{tpu_custom_call.1} parent=1 // pred_region
      %52 = vst [vmem:[#allocation2] sm:$0xff] 0.0
      %53 = vst [vmem:[#allocation2 + $0x8] sm:$0xff] 0.0
      %54 = vst [vmem:[#allocation2 + $0x10] sm:$0xff] 0.0
    $region21: #{tpu_custom_call.1} parent=1 // pred_fallthru
      _
    %v55 = vld [vmem:[#allocation3] sm:$0xff]
    %v56 = vld [vmem:[#allocation3 + $0x8] sm:$0xff]
    %v57 = vld [vmem:[#allocation6] sm:$0xff]
    %v58 = vld [vmem:[#allocation6 + $0x8] sm:$0xff]
    %v59 = vand.u32 2147483647, %v55
    %v60 = vand.u32 2147483647, %v56
    %v61 = vsub.f32 0.0, %v59
    %v62 = vsub.f32 0.0, %v60
    %v63 = vmul.f32 %v61, 1.442695
    %v64 = vpow.pop %v63
    %v65 = vmul.f32 %v62, 1.442695
    %v66 = vpow.pop %v65
    %v67 = vadd.f32 %v64, 1.0
    %v68 = vlog2.pop %v67
    %v69 = vmul.f32 %v68, 0.6931472
    %v70 = vmul.f32 -0.5, %v64
    %v71 = vadd.f32 %v70, 1.0
    %v72 = vmul.f32 %v71, %v64
    %v73 = vand.u32 2147483647, %v64
    %vm74 = vcmp.lt.f32.partialorder %v73, 0.0004427343
    %v75 = vsel %vm74, %v72, %v69
    %v76 = vadd.f32 %v66, 1.0
    %v77 = vlog2.pop %v76
    %v78 = vmul.f32 %v77, 0.6931472
    %v79 = vmul.f32 -0.5, %v66
    %v80 = vadd.f32 %v79, 1.0
    %v81 = vmul.f32 %v80, %v66
    %v82 = vand.u32 2147483647, %v66
    %vm83 = vcmp.lt.f32.partialorder %v82, 0.0004427343
    %v84 = vsel %vm83, %v81, %v78
    %vm85 = vcmp.ge.f32.partialorder %v55, 0.0
    %vm86 = vcmp.ge.f32.partialorder %v56, 0.0
    %v87 = vsel %vm85, 1.0, %v64
    %v88 = vsel %vm86, 1.0, %v66
    %v89 = vadd.f32 %v64, 1.0
    %v90 = vadd.f32 %v66, 1.0
    %v91 = vrcp.pop %v89
    %v92 = vrcp.pop %v90
    %v93 = vmul.f32 %v87, %v91
    %v94 = vmul.f32 %v88, %v92
    %v95 = vmax.f32 %v55, 0.0
    %v96 = vmax.f32 %v56, 0.0
    %v97 = vmul.f32 %v55, %v57
    %v98 = vmul.f32 %v56, %v58
    %v99 = vsub.f32 %v95, %v97
    %v100 = vsub.f32 %v96, %v98
    %v101 = vadd.f32 %v99, %v75
    %v102 = vadd.f32 %v100, %v84
    %v103 = vmin.f32 %v101, 100.0
    %v104 = vmin.f32 %v102, 100.0
    %v105 = vmul.f32 %v57, %v93
    %v106 = vmul.f32 %v58, %v94
    %v107 = vadd.f32 %v57, %v93
    %v108 = vadd.f32 %v58, %v94
    %v109 = vld [vmem:[#allocation2] sm:$0xff]
    %v110 = vadd.f32 %v105, %v106
    %v111 = vadd.f32 %v109, %v110
    %112 = vst [vmem:[#allocation2] sm:$0xff] %v111
    %s113 = scalar_lea.vmem [#allocation2], 8
    %v114 = vld [vmem:[%s113] sm:$0xff]
    %v115 = vadd.f32 %v107, %v108
    %v116 = vadd.f32 %v114, %v115
    %117 = vst [vmem:[%s113] sm:$0xff] %v116
    %s118 = scalar_lea.vmem [#allocation2], 16
    %v119 = vld [vmem:[%s118] sm:$0xff]
    %v120 = vadd.f32 %v103, %v104
    %v121 = vadd.f32 %v119, %v120
    %122 = vst [vmem:[%s118] sm:$0xff] %v121
    // Predicated region
    $region22: #{tpu_custom_call.1} parent=1 // pred_check
      %p123 = pneg %p48
    $region23: #{tpu_custom_call.1} parent=1 // pred_check_branch
      %125 = sbr.rel (%p123) target = $region25
    $region24: #{tpu_custom_call.1} parent=1 // pred_region
      %v126 = vld [vmem:[#allocation2] sm:$0xff]
      %v127 = vld [vmem:[#allocation2 + $0x8] sm:$0xff]
      %v128 = vld [vmem:[#allocation2 + $0x10] sm:$0xff]
      %129 = vst [vmem:[#allocation8] sm:$0xff] %v126
      %130 = vst [vmem:[#allocation8 + $0x8] sm:$0xff] %v127
      %131 = vst [vmem:[#allocation8 + $0x10] sm:$0xff] %v128
    $region25: #{tpu_custom_call.1} parent=1 // pred_fallthru
      _
    // Predicated region
    $region26: #{tpu_custom_call.1} parent=1 // pred_check
      _
    $region27: #{tpu_custom_call.1} parent=1 // pred_check_branch
      %133 = sbr.rel (0) target = $region29
    $region28: #{tpu_custom_call.1} parent=1 // pred_region
      %s135 = ssub.s32 384, 384
      %136 = vsyncadd [#allocation5], %s135
      %s137 = sshll.u32 [#allocation8], 4
      %s138 = int_to_ptr.vmem [resolvable:$true] %s137
      %143 = dma.vmem_to_hbm [thread:$0]  %s138, 384, %s2, [#allocation5], 128, 128, 8
    $region29: #{tpu_custom_call.1} parent=1 // pred_fallthru
      _
    // Predicated region
    $region30: #{tpu_custom_call.1} parent=1 // pred_check
      _
    $region31: #{tpu_custom_call.1} parent=1 // pred_check_branch
      %145 = sbr.rel (0) target = $region33
    $region32: #{tpu_custom_call.1} parent=1 // pred_region
      %146 = dma.done [#allocation5], 384
    $region33: #{tpu_custom_call.1} parent=1 // pred_fallthru
      _
    %147 = vsyncpa [#allocation4], 1
    %148 = vsyncpa [#allocation7], 1
    %149 = vsyncpa [#allocation5], 1

</llo_original>
